<compile_context>
chip_gen: v5e
topology: v5e:2x2
jax: 0.10.0
libtpu: 0.0.40
codegen_flags: <defaults>
</compile_context>

<pallas_src>
import functools

import jax
import jax.numpy as jnp
from jax.experimental import pallas as pl
from jax.experimental.pallas import tpu as pltpu


def _scorenet_kernel(x_ref, w1t_ref, b1_ref, w2t_ref, b2_ref, o_ref, *,
                     score_bias, calc_scores):
    # x_ref: (Cin, tn)  w1t: (H, Cin)  b1: (H, 1)  w2t: (Cout, H)  b2: (Cout, 1)
    x = x_ref[...].astype(jnp.float32)
    # hidden 1x1 conv (W1^T.x) + folded BN + ReLU                  -> (H, tn)
    h = jnp.dot(w1t_ref[...], x, preferred_element_type=jnp.float32)
    h = jnp.maximum(h + b1_ref[...], 0.0)
    # last 1x1 conv (W2^T.h) + bias                                -> (Cout, tn)
    s = jnp.dot(w2t_ref[...], h, preferred_element_type=jnp.float32) + b2_ref[...]
    if calc_scores == "softmax":
        # softmax over the channel (sublane) axis.  Exact divide: the kernel is
        # HBM-bound, so the EUP/VPU cost is free and rows sum to 1 exactly.
        m = jnp.max(s, axis=0, keepdims=True)
        e = jnp.exp(s - m)
        scores = e / jnp.sum(e, axis=0, keepdims=True)
    elif calc_scores == "sigmoid":
        scores = jax.nn.sigmoid(s)
    else:
        raise ValueError("Not Implemented!")
    if score_bias is not None and score_bias != 0.0:   # compiled out when bias==0
        scores = scores + score_bias
    o_ref[...] = scores.astype(o_ref.dtype)


def _choose_tile(nk, batch, tn_max=32768, min_tile=512, target_steps=4):
    """Pixel-tile size on the lane axis.

    Big tiles amortize the ~0.35us fixed per-grid-step overhead; a few steps
    (>= target_steps in total when possible) give the pipeline DMA/compute
    overlap and keep both v7x TensorCores busy.  Never shrinks a tile below
    `min_tile` lanes just to create steps.  Result is a multiple of 128 unless
    it covers the full N*K extent.
    """
    want = max(1, pl.cdiv(target_steps, max(batch, 1)))   # pixel tiles / batch elem
    tn = pl.cdiv(nk, want)
    tn = min(tn, tn_max)
    tn = max(tn, min(min_tile, nk))
    if tn >= nk:
        return nk                       # single full-extent tile per batch element
    return pl.cdiv(tn, 128) * 128       # lane-aligned partial tiles


def scorenet_forward(xyz, params, *, calc_scores="softmax", bias=0.0,
                     out_dtype=None, tn_max=32768, permute_output=True):
    """ScoreNet forward.

    xyz: (B, Cin, N, K) NCHW, like the PyTorch module.
    params: (w1, b1, w2, b2) with eval-mode BatchNorm already folded into
            conv1 (see init_params); shapes (Cin,H), (H,), (H,Cout), (Cout,).
    out_dtype: score dtype at the store (default: xyz.dtype).  bf16 halves the
            dominant output HBM traffic while keeping f32 math in-kernel.
    permute_output=True  -> (B, N, K, Cout), exactly the PyTorch .permute(0,2,3,1).
    permute_output=False -> kernel-native channels-first (B, Cout, N, K): skips a
            full extra HBM read+write of the output; fuse the permute into the
            consumer when possible (recommended for performance).
    """
    if calc_scores not in ("softmax", "sigmoid"):
        raise ValueError("Not Implemented!")
    # TODO(synk): only Python-scalar bias is supported (matches the module default).
    bias = float(bias)

    w1, b1, w2, b2 = params
    B, Cin, N, K = xyz.shape
    H = w1.shape[1]
    Cout = w2.shape[1]
    NK = N * K
    out_dtype = xyz.dtype if out_dtype is None else out_dtype

    # Free reshape: NCHW is contiguous over (N, K) -> no data movement.
    x = xyz.reshape(B, Cin, NK)

    tn = _choose_tile(NK, B, tn_max=tn_max)
    grid = (B, pl.cdiv(NK, tn))

    # Transposed weights so the pixel axis stays on lanes inside the kernel.
    # Both dots must stay on the MXU (a VPU fallback would flip the kernel to
    # VALU-bound on v5e/v6e); tiny contraction dims (4, 16) are fine there.
    w1t = jnp.transpose(w1).astype(jnp.float32)           # (H, Cin)
    w2t = jnp.transpose(w2).astype(jnp.float32)           # (Cout, H)
    b1c = b1.reshape(H, 1).astype(jnp.float32)
    b2c = b2.reshape(Cout, 1).astype(jnp.float32)

    kernel = functools.partial(_scorenet_kernel, score_bias=bias,
                               calc_scores=calc_scores)

    cost = pl.CostEstimate(
        flops=2 * B * NK * (Cin * H + H * Cout) + 6 * B * NK * Cout,
        transcendentals=B * NK * Cout,
        bytes_accessed=B * NK * (Cin * xyz.dtype.itemsize
                                 + Cout * jnp.dtype(out_dtype).itemsize)
        + (Cin * H + H + H * Cout + Cout) * 4,
    )

    out_cf = pl.pallas_call(
        kernel,
        out_shape=jax.ShapeDtypeStruct((B, Cout, NK), out_dtype),
        grid=grid,
        in_specs=[
            # Lane-dense input tiles; default double buffering is enough for
            # large tiles (partial last tile is safe: all ops are per-column).
            pl.BlockSpec((None, Cin, tn), lambda b, j: (b, 0, j)),
            pl.BlockSpec((H, Cin), lambda b, j: (0, 0)),
            pl.BlockSpec((H, 1), lambda b, j: (0, 0)),
            pl.BlockSpec((Cout, H), lambda b, j: (0, 0)),
            pl.BlockSpec((Cout, 1), lambda b, j: (0, 0)),
        ],
        # Lane-dense output tiles -> unmasked vector stores.
        out_specs=pl.BlockSpec((None, Cout, tn), lambda b, j: (b, 0, j)),
        compiler_params=pltpu.CompilerParams(
            dimension_semantics=("parallel", "parallel")),
        cost_estimate=cost,
    )(x, w1t, b1c, w2t, b2c)

    out_cf = out_cf.reshape(B, Cout, N, K)     # free reshape, channels-first
    if not permute_output:
        return out_cf
    # Drop-in PyTorch semantics: .permute(0, 2, 3, 1) -> (B, N, K, Cout).
    # (This is an extra HBM pass; perf-sensitive callers should prefer
    #  permute_output=False and fuse the permute into the consumer.)
    return jnp.transpose(out_cf, (0, 2, 3, 1))


def init_params(key, in_channel, out_channel, hidden=16, eps=1e-5):
    """Deterministic synthetic parameters; BN (eval mode) folded into conv1."""
    k1, k2, k3, k4, k5, k6, k7 = jax.random.split(key, 7)
    # conv1: (hidden, in_channel, 1, 1) in torch -> stored as (in_channel, hidden)
    w1 = jax.random.normal(k1, (in_channel, hidden), jnp.float32) * 0.1
    # BN params for the hidden layer
    gamma = 1.0 + 0.1 * jax.random.normal(k2, (hidden,), jnp.float32)
    beta = 0.1 * jax.random.normal(k3, (hidden,), jnp.float32)
    run_mean = 0.1 * jax.random.normal(k4, (hidden,), jnp.float32)
    run_var = jnp.abs(1.0 + 0.1 * jax.random.normal(k5, (hidden,), jnp.float32))
    scale = gamma / jnp.sqrt(run_var + eps)
    w1_f = w1 * scale[None, :]                    # fold BN scale
    b1_f = beta - run_mean * scale                # fold BN shift (conv1 has no bias)
    # conv2 (last, bias=True since last_bn=False): (out, hidden, 1, 1) -> (hidden, out)
    w2 = jax.random.normal(k6, (hidden, out_channel), jnp.float32) * 0.1
    b2 = 0.1 * jax.random.normal(k7, (out_channel,), jnp.float32)
    return (w1_f, b1_f, w2, b2)


if __name__ == "__main__":
    key = jax.random.PRNGKey(0)
    kx, kp = jax.random.split(key)

    B, Cin, N, K = 2, 4, 16, 16          # 256 pixels per batch element
    Cout, hidden = 8, 16

    xyz = jax.random.normal(kx, (B, Cin, N, K), jnp.float32)
    params = init_params(kp, Cin, Cout, hidden)

    # Pure-JAX reference of the same (folded-BN) math, PyTorch output layout.
    w1, b1, w2, b2 = params
    xr = jnp.transpose(xyz, (0, 2, 3, 1)).reshape(-1, Cin)
    hdn = jnp.maximum(xr @ w1 + b1, 0.0)
    ref = jax.nn.softmax(hdn @ w2 + b2, axis=-1).reshape(B, N, K, Cout)

    # 1) Drop-in module semantics: (B, N, K, Cout), f32.
    out = jax.block_until_ready(
        scorenet_forward(xyz, params, calc_scores="softmax", bias=0.0))
    assert out.shape == (B, N, K, Cout)
    # Exact divide in the kernel -> channel softmax sums to 1 tightly.
    assert jnp.allclose(jnp.sum(out, axis=-1), 1.0, atol=1e-4)
    assert jnp.allclose(out, ref, atol=5e-3, rtol=5e-3)

    # 2) Fused-consumer fast path: channels-first layout + bf16 store.
    out_cf = jax.block_until_ready(
        scorenet_forward(xyz, params, permute_output=False,
                         out_dtype=jnp.bfloat16))
    assert out_cf.shape == (B, Cout, N, K)
    out_cf_nhwc = jnp.transpose(out_cf, (0, 2, 3, 1)).astype(jnp.float32)
    assert jnp.allclose(out_cf_nhwc, ref, atol=2e-2)

    print("KERNEL_OK")
</pallas_src>

<mosaic_0001>
module attributes {stable_mosaic.version = 11 : i64} {
  func.func @_scorenet_kernel(%arg0: i32, %arg1: i32, %arg2: memref<1x4x256xf32, #tpu.memory_space<vmem>>, %arg3: memref<16x4xf32, #tpu.memory_space<vmem>>, %arg4: memref<16x1xf32, #tpu.memory_space<vmem>>, %arg5: memref<8x16xf32, #tpu.memory_space<vmem>>, %arg6: memref<8x1xf32, #tpu.memory_space<vmem>>, %arg7: memref<1x8x256xf32, #tpu.memory_space<vmem>>) attributes {dimension_semantics = [#tpu.dimension_semantics<parallel>, #tpu.dimension_semantics<parallel>], iteration_bounds = array<i64: 2, 1>, scalar_prefetch = 0 : i64, scratch_operands = 0 : i64, tpu.core_type = #tpu.core_type<tc>, window_params = [{transform_indices = @transform_0, window_bounds = array<i64: 1, 4, 256>}, {pipeline_mode = #tpu.pipeline_mode<synchronous>, transform_indices = @transform_1, window_bounds = array<i64: 16, 4>}, {pipeline_mode = #tpu.pipeline_mode<synchronous>, transform_indices = @transform_2, window_bounds = array<i64: 16, 1>}, {pipeline_mode = #tpu.pipeline_mode<synchronous>, transform_indices = @transform_3, window_bounds = array<i64: 8, 16>}, {pipeline_mode = #tpu.pipeline_mode<synchronous>, transform_indices = @transform_4, window_bounds = array<i64: 8, 1>}, {transform_indices = @transform_5, window_bounds = array<i64: 1, 8, 256>}]} {
    %c0 = arith.constant 0 : index
    %c0_0 = arith.constant 0 : index
    %c0_1 = arith.constant 0 : index
    %0 = vector.load %arg2[%c0, %c0_0, %c0_1] : memref<1x4x256xf32, #tpu.memory_space<vmem>>, vector<1x4x256xf32>
    %1 = vector.shape_cast %0 : vector<1x4x256xf32> to vector<4x256xf32>
    %c0_2 = arith.constant 0 : index
    %c0_3 = arith.constant 0 : index
    %2 = vector.load %arg3[%c0_2, %c0_3] : memref<16x4xf32, #tpu.memory_space<vmem>>, vector<16x4xf32>
    %cst = arith.constant dense<0.000000e+00> : vector<16x256xf32>
    %3 = tpu.matmul %2, %1, %cst {dimension_numbers = #tpu.dot_dimension_numbers<[1], [0], [0], [1], [0, 0, 1, 1], [], []>} : vector<16x4xf32>, vector<4x256xf32>, vector<16x256xf32> -> vector<16x256xf32>
    %c0_4 = arith.constant 0 : index
    %c0_5 = arith.constant 0 : index
    %4 = vector.load %arg4[%c0_4, %c0_5] : memref<16x1xf32, #tpu.memory_space<vmem>>, vector<16x1xf32>
    %5 = vector.broadcast %4 : vector<16x1xf32> to vector<16x256xf32>
    %6 = arith.addf %3, %5 : vector<16x256xf32>
    %cst_6 = arith.constant 0.000000e+00 : f32
    %7 = vector.broadcast %cst_6 : f32 to vector<16x256xf32>
    %8 = arith.maximumf %6, %7 : vector<16x256xf32>
    %c0_7 = arith.constant 0 : index
    %c0_8 = arith.constant 0 : index
    %9 = vector.load %arg5[%c0_7, %c0_8] : memref<8x16xf32, #tpu.memory_space<vmem>>, vector<8x16xf32>
    %cst_9 = arith.constant dense<0.000000e+00> : vector<8x256xf32>
    %10 = tpu.matmul %9, %8, %cst_9 {dimension_numbers = #tpu.dot_dimension_numbers<[1], [0], [0], [1], [0, 0, 1, 1], [], []>} : vector<8x16xf32>, vector<16x256xf32>, vector<8x256xf32> -> vector<8x256xf32>
    %c0_10 = arith.constant 0 : index
    %c0_11 = arith.constant 0 : index
    %11 = vector.load %arg6[%c0_10, %c0_11] : memref<8x1xf32, #tpu.memory_space<vmem>>, vector<8x1xf32>
    %12 = vector.broadcast %11 : vector<8x1xf32> to vector<8x256xf32>
    %13 = arith.addf %10, %12 : vector<8x256xf32>
    %cst_12 = arith.constant dense<0xFF800000> : vector<256xf32>
    %14 = vector.multi_reduction <maximumf>, %13, %cst_12 [0] : vector<8x256xf32> to vector<256xf32>
    %15 = vector.shape_cast %14 : vector<256xf32> to vector<1x256xf32>
    %16 = vector.broadcast %15 : vector<1x256xf32> to vector<8x256xf32>
    %17 = arith.subf %13, %16 : vector<8x256xf32>
    %18 = math.exp %17 : vector<8x256xf32>
    %cst_13 = arith.constant dense<0.000000e+00> : vector<256xf32>
    %19 = vector.multi_reduction <add>, %18, %cst_13 [0] : vector<8x256xf32> to vector<256xf32>
    %20 = vector.shape_cast %19 : vector<256xf32> to vector<1x256xf32>
    %21 = vector.broadcast %20 : vector<1x256xf32> to vector<8x256xf32>
    %22 = arith.divf %18, %21 : vector<8x256xf32>
    %c0_14 = arith.constant 0 : index
    %c0_15 = arith.constant 0 : index
    %c0_16 = arith.constant 0 : index
    %23 = vector.load %arg7[%c0_14, %c0_15, %c0_16] : memref<1x8x256xf32, #tpu.memory_space<vmem>>, vector<1x8x256xf32>
    %24 = vector.shape_cast %23 : vector<1x8x256xf32> to vector<8x256xf32>
    %25 = vector.shape_cast %22 : vector<8x256xf32> to vector<1x8x256xf32>
    tpu.vector_store %arg7[%c0_14, %c0_15, %c0_16], %25 {strides = array<i32>} : memref<1x8x256xf32, #tpu.memory_space<vmem>>, vector<1x8x256xf32>,
    return
  }
  func.func @transform_0(%arg0: i32, %arg1: i32) -> (i32, i32, i32) {
    %c0_i32 = arith.constant 0 : i32
    %c0_i32_0 = arith.constant 0 : i32
    return %arg0, %c0_i32, %arg1 : i32, i32, i32
  }
  func.func @transform_1(%arg0: i32, %arg1: i32) -> (i32, i32) {
    %c0_i32 = arith.constant 0 : i32
    %c0_i32_0 = arith.constant 0 : i32
    %c0_i32_1 = arith.constant 0 : i32
    return %c0_i32, %c0_i32_0 : i32, i32
  }
  func.func @transform_2(%arg0: i32, %arg1: i32) -> (i32, i32) {
    %c0_i32 = arith.constant 0 : i32
    %c0_i32_0 = arith.constant 0 : i32
    %c0_i32_1 = arith.constant 0 : i32
    return %c0_i32, %c0_i32_0 : i32, i32
  }
  func.func @transform_3(%arg0: i32, %arg1: i32) -> (i32, i32) {
    %c0_i32 = arith.constant 0 : i32
    %c0_i32_0 = arith.constant 0 : i32
    %c0_i32_1 = arith.constant 0 : i32
    return %c0_i32, %c0_i32_0 : i32, i32
  }
  func.func @transform_4(%arg0: i32, %arg1: i32) -> (i32, i32) {
    %c0_i32 = arith.constant 0 : i32
    %c0_i32_0 = arith.constant 0 : i32
    %c0_i32_1 = arith.constant 0 : i32
    return %c0_i32, %c0_i32_0 : i32, i32
  }
  func.func @transform_5(%arg0: i32, %arg1: i32) -> (i32, i32, i32) {
    %c0_i32 = arith.constant 0 : i32
    %c0_i32_0 = arith.constant 0 : i32
    return %arg0, %c0_i32, %arg1 : i32, i32, i32
  }
}

</mosaic_0001>

<llo_original>
// kernel: tpu_custom_call.1
$region0: #{tpu_custom_call.1}
  #allocation0 [shape = 'u32[]', space=smem, size = 0x4, offset = 0x4, fixed_abs, tag = 'smem constant byte address 0x4 - core index']
  #allocation1 [shape = 'u32[72,128]{1,0:T(1,128)}', space=vmem, size = 0x9000, scoped, tag = 'internal scratch']
  %s0 = inlined_call_operand.vmem [shape: f32[2,4,256], index: 0, kind: input, shape index: {}]
  %s1 = inlined_call_operand.vmem [shape: f32[16,4], index: 1, kind: input, shape index: {}]
  %s2 = inlined_call_operand.vmem [shape: f32[16,1], index: 2, kind: input, shape index: {}]
  %s3 = inlined_call_operand.vmem [shape: f32[8,16], index: 3, kind: input, shape index: {}]
  %s4 = inlined_call_operand.vmem [shape: f32[8,1], index: 4, kind: input, shape index: {}]
  %s5 = inlined_call_operand.hbm [shape: f32[2,8,256], index: 5, kind: output, shape index: {}]
  %s6 = sld [smem:[#allocation0]]
  $region53: #{tpu_custom_call.1} parent=0
    _
  %s8 = ssub.s32 1, %s6
  %s9 = scalar_select 0, %s8, %s6
  $region1: #{tpu_custom_call.1} parent=0
    #allocation2 [shape = 'u8[16384]{0}', space=vmem, size = 0x4000, scoped, tag = 'output window, operand 0']
    #allocation3 [shape = 's32[2]{0}', space=sflag, size = 0x8, scoped, tag = 'scoped memory for tpu_custom_call.1']
    %10 = vsyncpa [#allocation3], 0
    %s11 = scalar_lea.sflag [#allocation3], 1
    %12 = vsyncpa %s11, 0
    loop: start=0, step=1, limit=4
    $region2: #{tpu_custom_call.1} parent=1 // loop_pre_header
      _
    $region3: #{tpu_custom_call.1} parent=1 // loop_header
      %s14 = sphi 0, %s18
      %p15 = scmp.ge.s32.totalorder %s14, 4
      %s21 = sphi 0, %s33
      %s22 = sphi 0, %s29
      %s23 = sphi 0, %s21
      %s24 = sphi 0, %s22
      %s25 = sphi 0, %s23
      %s26 = sphi 0, %s24
      %s38 = sphi 0, %s40
      %s41 = sphi 0, %s38
      %s42 = sphi 0, %s41
      %s58 = sphi 0, %s42
      %s62 = sphi 0, %s62
      %s64 = sphi 0, %s62
      %s65 = sphi 0, %s64
      %s79 = sphi 0, %s65
      %s83 = sphi 0, %s83
      %s85 = sphi 0, %s83
      %s86 = sphi 0, %s85
      %s100 = sphi 0, %s86
      %s104 = sphi 0, %s104
      %s106 = sphi 0, %s104
      %s107 = sphi 0, %s106
      %s121 = sphi 0, %s107
      %s125 = sphi 0, %s125
      %s127 = sphi 0, %s125
      %s128 = sphi 0, %s127
      %s142 = sphi 0, %s128
      %s150 = sphi 0, %s152
      %s153 = sphi 0, %s150
      %s154 = sphi 0, %s153
      %s170 = sphi 0, %s154
    $region4: #{tpu_custom_call.1} parent=1 // loop_header_branch
      %17 = sbr.rel (%p15) target = $region8
    $region5: #{tpu_custom_call.1} parent=1 // loop_body
      %s19 = ssub.s32 %s14, 1
      %s20 = ssub.s32 %s14, 2
      %s27 = sadd.s32 1, %s22
      %p28 = scmp.ge.s32.totalorder %s27, 1
      %s29 = scalar_select %p28, 0, %s27
      %s30 = sadd.s32 1, %s21
      %s31 = scalar_select %p28, %s30, %s21
      %p32 = scmp.ge.s32.totalorder %s31, 2
      %s33 = scalar_select %p32, 0, %s31
      %s34 = ssub.s32 %s21, %s33
      %s35 = ssub.s32 %s22, %s29
      %s36 = sor.u32 %s34, %s35
      %p37 = scmp.eq.s32.totalorder %s36, 0
      %s39 = sadd.s32 %s38, 1
      %s40 = scalar_select %p37, %s38, %s39
      %p43 = pneg %p37
      %p44 = scmp.eq.s32.totalorder %s14, 1
      %p45 = por %p43, %p44
      %p46 = scmp.ne.s32.totalorder %s38, %s41
      %p47 = scmp.eq.s32.totalorder %s14, 0
      %p48 = por %p46, %p47
      %p49 = scmp.ne.s32.totalorder %s38, %s41
      %p50 = scmp.eq.s32.totalorder %s19, 1
      %p51 = por %p49, %p50
      %p52 = scmp.ne.s32.totalorder %s41, %s42
      %p53 = scmp.eq.s32.totalorder %s19, 0
      %p54 = por %p52, %p53
      %p55 = scmp.ne.s32.totalorder %s41, %s42
      %p56 = scmp.eq.s32.totalorder %s20, 1
      %p57 = por %p55, %p56
      %p59 = scmp.ne.s32.totalorder %s42, %s58
      %p60 = scmp.eq.s32.totalorder %s20, 0
      %p61 = por %p59, %p60
      %s63 = sadd.s32 %s62, 1
      %p66 = scmp.eq.s32.totalorder %s14, 1
      %p67 = scmp.ne.s32.totalorder %s62, %s64
      %p68 = scmp.eq.s32.totalorder %s14, 0
      %p69 = por %p67, %p68
      %p70 = scmp.ne.s32.totalorder %s62, %s64
      %p71 = scmp.eq.s32.totalorder %s19, 1
      %p72 = por %p70, %p71
      %p73 = scmp.ne.s32.totalorder %s64, %s65
      %p74 = scmp.eq.s32.totalorder %s19, 0
      %p75 = por %p73, %p74
      %p76 = scmp.ne.s32.totalorder %s64, %s65
      %p77 = scmp.eq.s32.totalorder %s20, 1
      %p78 = por %p76, %p77
      %p80 = scmp.ne.s32.totalorder %s65, %s79
      %p81 = scmp.eq.s32.totalorder %s20, 0
      %p82 = por %p80, %p81
      %s84 = sadd.s32 %s83, 1
      %p87 = scmp.eq.s32.totalorder %s14, 1
      %p88 = scmp.ne.s32.totalorder %s83, %s85
      %p89 = scmp.eq.s32.totalorder %s14, 0
      %p90 = por %p88, %p89
      %p91 = scmp.ne.s32.totalorder %s83, %s85
      %p92 = scmp.eq.s32.totalorder %s19, 1
      %p93 = por %p91, %p92
      %p94 = scmp.ne.s32.totalorder %s85, %s86
      %p95 = scmp.eq.s32.totalorder %s19, 0
      %p96 = por %p94, %p95
      %p97 = scmp.ne.s32.totalorder %s85, %s86
      %p98 = scmp.eq.s32.totalorder %s20, 1
      %p99 = por %p97, %p98
      %p101 = scmp.ne.s32.totalorder %s86, %s100
      %p102 = scmp.eq.s32.totalorder %s20, 0
      %p103 = por %p101, %p102
      %s105 = sadd.s32 %s104, 1
      %p108 = scmp.eq.s32.totalorder %s14, 1
      %p109 = scmp.ne.s32.totalorder %s104, %s106
      %p110 = scmp.eq.s32.totalorder %s14, 0
      %p111 = por %p109, %p110
      %p112 = scmp.ne.s32.totalorder %s104, %s106
      %p113 = scmp.eq.s32.totalorder %s19, 1
      %p114 = por %p112, %p113
      %p115 = scmp.ne.s32.totalorder %s106, %s107
      %p116 = scmp.eq.s32.totalorder %s19, 0
      %p117 = por %p115, %p116
      %p118 = scmp.ne.s32.totalorder %s106, %s107
      %p119 = scmp.eq.s32.totalorder %s20, 1
      %p120 = por %p118, %p119
      %p122 = scmp.ne.s32.totalorder %s107, %s121
      %p123 = scmp.eq.s32.totalorder %s20, 0
      %p124 = por %p122, %p123
      %s126 = sadd.s32 %s125, 1
      %p129 = scmp.eq.s32.totalorder %s14, 1
      %p130 = scmp.ne.s32.totalorder %s125, %s127
      %p131 = scmp.eq.s32.totalorder %s14, 0
      %p132 = por %p130, %p131
      %p133 = scmp.ne.s32.totalorder %s125, %s127
      %p134 = scmp.eq.s32.totalorder %s19, 1
      %p135 = por %p133, %p134
      %p136 = scmp.ne.s32.totalorder %s127, %s128
      %p137 = scmp.eq.s32.totalorder %s19, 0
      %p138 = por %p136, %p137
      %p139 = scmp.ne.s32.totalorder %s127, %s128
      %p140 = scmp.eq.s32.totalorder %s20, 1
      %p141 = por %p139, %p140
      %p143 = scmp.ne.s32.totalorder %s128, %s142
      %p144 = scmp.eq.s32.totalorder %s20, 0
      %p145 = por %p143, %p144
      %s146 = ssub.s32 %s21, %s33
      %s147 = ssub.s32 %s22, %s29
      %s148 = sor.u32 %s146, %s147
      %p149 = scmp.eq.s32.totalorder %s148, 0
      %s151 = sadd.s32 %s150, 1
      %s152 = scalar_select %p149, %s150, %s151
      %p155 = pneg %p149
      %p156 = scmp.eq.s32.totalorder %s14, 1
      %p157 = por %p155, %p156
      %p158 = scmp.ne.s32.totalorder %s150, %s153
      %p159 = scmp.eq.s32.totalorder %s14, 0
      %p160 = por %p158, %p159
      %p161 = scmp.ne.s32.totalorder %s150, %s153
      %p162 = scmp.eq.s32.totalorder %s19, 1
      %p163 = por %p161, %p162
      %p164 = scmp.ne.s32.totalorder %s153, %s154
      %p165 = scmp.eq.s32.totalorder %s19, 0
      %p166 = por %p164, %p165
      %p167 = scmp.ne.s32.totalorder %s153, %s154
      %p168 = scmp.eq.s32.totalorder %s20, 1
      %p169 = por %p167, %p168
      %p171 = scmp.ne.s32.totalorder %s154, %s170
      %p172 = scmp.eq.s32.totalorder %s20, 0
      %p173 = por %p171, %p172
      %p174 = scmp.le.s32.totalorder 1, %s14
      %p175 = scmp.lt.s32.totalorder %s14, 3
      %p176 = pnand %p174, %p175
      %p177 = pneg %p176
      // Predicated region
      $region9: #{tpu_custom_call.1} parent=5 // pred_check
        _
      $region10: #{tpu_custom_call.1} parent=5 // pred_check_branch
        %179 = sbr.rel (%p176) target = $region12
      $region11: #{tpu_custom_call.1} parent=5 // pred_region
        %s180 = ssub.s32 %s14, 1
        // Predicated region
        $region13: #{tpu_custom_call.1} parent=11 // pred_check
          %p181 = pneg %p75
        $region14: #{tpu_custom_call.1} parent=11 // pred_check_branch
          %183 = sbr.rel (%p181) target = $region16
        $region15: #{tpu_custom_call.1} parent=11 // pred_region
          _
        $region16: #{tpu_custom_call.1} parent=11 // pred_fallthru
          _
        // Predicated region
        $region17: #{tpu_custom_call.1} parent=11 // pred_check
          %p184 = pneg %p96
        $region18: #{tpu_custom_call.1} parent=11 // pred_check_branch
          %186 = sbr.rel (%p184) target = $region20
        $region19: #{tpu_custom_call.1} parent=11 // pred_region
          _
        $region20: #{tpu_custom_call.1} parent=11 // pred_fallthru
          _
        // Predicated region
        $region21: #{tpu_custom_call.1} parent=11 // pred_check
          %p187 = pneg %p117
        $region22: #{tpu_custom_call.1} parent=11 // pred_check_branch
          %189 = sbr.rel (%p187) target = $region24
        $region23: #{tpu_custom_call.1} parent=11 // pred_region
          _
        $region24: #{tpu_custom_call.1} parent=11 // pred_fallthru
          _
        // Predicated region
        $region25: #{tpu_custom_call.1} parent=11 // pred_check
          %p190 = pneg %p138
        $region26: #{tpu_custom_call.1} parent=11 // pred_check_branch
          %192 = sbr.rel (%p190) target = $region28
        $region27: #{tpu_custom_call.1} parent=11 // pred_region
          _
        $region28: #{tpu_custom_call.1} parent=11 // pred_fallthru
          _
      $region12: #{tpu_custom_call.1} parent=5 // pred_fallthru
        _
      %p193 = scmp.lt.s32.totalorder %s14, 2
      // Predicated region
      $region29: #{tpu_custom_call.1} parent=5 // pred_check
        %p194 = pneg %p193
      $region30: #{tpu_custom_call.1} parent=5 // pred_check_branch
        %196 = sbr.rel (%p194) target = $region32
      $region31: #{tpu_custom_call.1} parent=5 // pred_region
        // Predicated region
        $region33: #{tpu_custom_call.1} parent=31 // pred_check
          %p197 = pneg %p48
        $region34: #{tpu_custom_call.1} parent=31 // pred_check_branch
          %199 = sbr.rel (%p197) target = $region36
        $region35: #{tpu_custom_call.1} parent=31 // pred_region
          %s200 = smul.u32 2, %s22
          %p201 = scmp.lt.s32.totalorder %s21, 1
          %s202 = scalar_select %p201, %s21, 1
          %p203 = scmp.lt.s32.totalorder %s200, 1
          %s204 = scalar_select %p203, %s200, 1
          %s205 = smul.addr %s202, 2
          %s206 = sadd.s32 %s204, %s205
          %s207 = smul.addr %s206, 4
          %s208 = scalar_lea.vmem %s0, %s207
          %s209 = smul.u32 2, %s22
        $region36: #{tpu_custom_call.1} parent=31 // pred_fallthru
          _
      $region32: #{tpu_custom_call.1} parent=5 // pred_fallthru
        _
      %p210 = scmp.le.s32.totalorder 1, %s14
      %p211 = scmp.lt.s32.totalorder %s14, 3
      %p212 = pnand %p210, %p211
      %p213 = pneg %p212
      // Predicated region
      $region37: #{tpu_custom_call.1} parent=5 // pred_check
        _
      $region38: #{tpu_custom_call.1} parent=5 // pred_check_branch
        %215 = sbr.rel (%p212) target = $region40
      $region39: #{tpu_custom_call.1} parent=5 // pred_region
        %s216 = ssub.s32 %s14, 1
        %s217 = smul.u32 2, %s24
        %p218 = scmp.lt.s32.totalorder %s23, 1
        %s219 = scalar_select %p218, %s23, 1
        %p220 = scmp.lt.s32.totalorder %s217, 1
        %s221 = scalar_select %p220, %s217, 1
        %s222 = smul.addr %s219, 2
        %s223 = sadd.s32 %s221, %s222
        %s224 = smul.addr %s223, 4
        %s225 = scalar_lea.vmem %s0, %s224
        %p226 = pneg %p54
        %p227 = pneg %p51
        %p228 = pneg %p75
        %p229 = pneg %p72
        %p230 = pneg %p96
        %p231 = pneg %p93
        %p232 = pneg %p117
        %p233 = pneg %p114
        %p234 = pneg %p138
        %p235 = pneg %p135
        %p236 = pneg %p166
        %p237 = pneg %p163
        %s238 = sand.u32 %s153, 1
        %s239 = scalar_lea.sflag [#allocation3], %s238
        %s240 = sand.u32 %s153, 1
        %s241 = smul.addr %s240, 16
        %s242 = scalar_lea.vmem [#allocation2], %s241
        %s243 = smul.u32 2, %s24
        %p244 = scmp.lt.s32.totalorder %s23, 1
        %s245 = scalar_select %p244, %s23, 1
        %p246 = scmp.lt.s32.totalorder %s243, 1
        %s247 = scalar_select %p246, %s243, 1
        %s248 = smul.addr %s245, 2
        %s249 = sadd.s32 %s247, %s248
        %s250 = smul.addr %s249, 4
        %s251 = scalar_lea.vmem %s0, %s250
        %s252 = smul.u32 2, %s24
        %s253 = smul.u32 2, %s24
        %v254 = vld [vmem:[%s251] sm:$0xff]
        %v255 = vld [vmem:[%s1] sm:$0xff]
        %v256 = vld [vmem:[%s1 + $0x8] sm:$0xff]
        %v257 = vld [vmem:[%s2] sm:$0xff]
        %v258 = vld [vmem:[%s2 + $0x8] sm:$0xff]
        %260 = vset.pattern.permute.xlu0 0
        %261 = vperm.xlu0 %260, %v257
        %v262 = vpop.permute.xlu0 %261
        %265 = vset.pattern.permute.xlu0 0
        %266 = vperm.xlu0 %265, %v258
        %v267 = vpop.permute.xlu0 %266
        %270 = vst [vmem:[#allocation1] ss:$2 sm:$0xff] %v254
        %v271 = vld.sshfl [vmem:[#allocation1] sm:$0xff pattern:$0x75316420]
        %v272 = vld.sshfl [vmem:[#allocation1 + $0x8] sm:$0xff pattern:$0x75316420]
        %vm273 = vcmask 31744
        %v275 = vsel %vm273, %v255, 0
        %v278 = vsel %vm273, %v256, 0
        %vm280 = vcmask 1043456
        %v281 = vsel %vm280, %v271, 0
        %v283 = vsel %vm280, %v272, 0
        %285 = vmatpush.msra.mxu0 0.0
        %286 = vmatpush.msra.mxu0 0.0
        %287 = vmatpush.msra.mxu0 0.0
        %288 = vmatpush.msra.mxu0 0.0
        %289 = vmatpush.msra.mxu0 0.0
        %290 = vmatpush.msra.mxu0 0.0
        %291 = vmatpush.msra.mxu0 0.0
        %292 = vmatpush.msra.mxu0 0.0
        %293 = vmatpush.msra.mxu0 0.0
        %294 = vmatpush.msra.mxu0 0.0
        %295 = vmatpush.msra.mxu0 0.0
        %296 = vmatpush.msra.mxu0 0.0
        %297 = vmatpush.msra.mxu0 0.0
        %298 = vmatpush.msra.mxu0 0.0
        %299 = vmatpush.msra.mxu0 0.0
        %300 = vmatpush.msra.mxu0 %v281
        %301 = vmatmul.f32.gmra.mxu0 %v275
        %v302 = vpop.f32.mrf.mxu0
        %v303 = vadd.f32 %v262, %v302
        %304 = vmatmul.f32.gmra.mxu0 %v278
        %v305 = vpop.f32.mrf.mxu0
        %v306 = vadd.f32 %v267, %v305
        %307 = vdwg.mxu0
        %308 = vmatpush.msra.mxu0 0.0
        %309 = vmatpush.msra.mxu0 0.0
        %310 = vmatpush.msra.mxu0 0.0
        %311 = vmatpush.msra.mxu0 0.0
        %312 = vmatpush.msra.mxu0 0.0
        %313 = vmatpush.msra.mxu0 0.0
        %314 = vmatpush.msra.mxu0 0.0
        %315 = vmatpush.msra.mxu0 0.0
        %316 = vmatpush.msra.mxu0 0.0
        %317 = vmatpush.msra.mxu0 0.0
        %318 = vmatpush.msra.mxu0 0.0
        %319 = vmatpush.msra.mxu0 0.0
        %320 = vmatpush.msra.mxu0 0.0
        %321 = vmatpush.msra.mxu0 0.0
        %322 = vmatpush.msra.mxu0 0.0
        %323 = vmatpush.msra.mxu0 %v283
        %324 = vmatmul.f32.gmra.mxu0 %v275
        %v325 = vpop.f32.mrf.mxu0
        %v326 = vadd.f32 %v262, %v325
        %327 = vmatmul.f32.gmra.mxu0 %v278
        %v328 = vpop.f32.mrf.mxu0
        %v329 = vadd.f32 %v267, %v328
        %330 = vdwg.mxu0
        %v331 = vmax.f32 %v303, 0.0
        %v332 = vmax.f32 %v326, 0.0
        %v333 = vmax.f32 %v306, 0.0
        %v334 = vmax.f32 %v329, 0.0
        %v335 = vld [vmem:[%s3] sm:$0xff]
        %v336 = vld [vmem:[%s4] sm:$0xff]
        %338 = vset.pattern.permute.xlu0 0
        %339 = vperm.xlu0 %338, %v336
        %v340 = vpop.permute.xlu0 %339
        %vm342 = vcmask 130048
        %v344 = vsel %vm342, %v335, 0
        %346 = vmatpush.msra.mxu0 0.0
        %347 = vmatpush.msra.mxu0 0.0
        %348 = vmatpush.msra.mxu0 0.0
        %349 = vmatpush.msra.mxu0 0.0
        %350 = vmatpush.msra.mxu0 0.0
        %351 = vmatpush.msra.mxu0 0.0
        %352 = vmatpush.msra.mxu0 0.0
        %353 = vmatpush.msra.mxu0 0.0
        %354 = vmatpush.msra.mxu0 0.0
        %355 = vmatpush.msra.mxu0 0.0
        %356 = vmatpush.msra.mxu0 0.0
        %357 = vmatpush.msra.mxu0 0.0
        %358 = vmatpush.msra.mxu0 0.0
        %359 = vmatpush.msra.mxu0 0.0
        %360 = vmatpush.msra.mxu0 %v333
        %361 = vmatpush.msra.mxu0 %v331
        %362 = vmatmul.f32.gmra.mxu0 %v344
        %v363 = vpop.f32.mrf.mxu0
        %v364 = vadd.f32 %v340, %v363
        %365 = vdwg.mxu0
        %366 = vmatpush.msra.mxu0 0.0
        %367 = vmatpush.msra.mxu0 0.0
        %368 = vmatpush.msra.mxu0 0.0
        %369 = vmatpush.msra.mxu0 0.0
        %370 = vmatpush.msra.mxu0 0.0
        %371 = vmatpush.msra.mxu0 0.0
        %372 = vmatpush.msra.mxu0 0.0
        %373 = vmatpush.msra.mxu0 0.0
        %374 = vmatpush.msra.mxu0 0.0
        %375 = vmatpush.msra.mxu0 0.0
        %376 = vmatpush.msra.mxu0 0.0
        %377 = vmatpush.msra.mxu0 0.0
        %378 = vmatpush.msra.mxu0 0.0
        %379 = vmatpush.msra.mxu0 0.0
        %380 = vmatpush.msra.mxu0 %v334
        %381 = vmatpush.msra.mxu0 %v332
        %382 = vmatmul.f32.gmra.mxu0 %v344
        %v383 = vpop.f32.mrf.mxu0
        %v384 = vadd.f32 %v340, %v383
        %385 = vdwg.mxu0
        %v386 = vrot.slane %v364, 4
        %v387 = vmax.f32 %v364, %v386
        %v388 = vrot.slane %v387, 2
        %v389 = vmax.f32 %v387, %v388
        %v390 = vrot.slane %v389, 1
        %v391 = vmax.f32 %v389, %v390
        %v392 = vrot.slane %v384, 4
        %v393 = vmax.f32 %v384, %v392
        %v394 = vrot.slane %v393, 2
        %v395 = vmax.f32 %v393, %v394
        %v396 = vrot.slane %v395, 1
        %v397 = vmax.f32 %v395, %v396
        %v398 = vsub.f32 %v364, %v391
        %v399 = vsub.f32 %v384, %v397
        %v400 = vmul.f32 %v398, 1.442695
        %v401 = vpow.pop %v400
        %v402 = vmul.f32 %v399, 1.442695
        %v403 = vpow.pop %v402
        %v404 = vrot.slane %v401, 4
        %v405 = vadd.f32 %v401, %v404
        %v406 = vrot.slane %v405, 2
        %v407 = vadd.f32 %v405, %v406
        %v408 = vrot.slane %v407, 1
        %v409 = vadd.f32 %v407, %v408
        %v410 = vrot.slane %v403, 4
        %v411 = vadd.f32 %v403, %v410
        %v412 = vrot.slane %v411, 2
        %v413 = vadd.f32 %v411, %v412
        %v414 = vrot.slane %v413, 1
        %v415 = vadd.f32 %v413, %v414
        %v416 = vrcp.pop %v409
        %v417 = vmul.f32 %v409, %v416
        %v418 = vsub.f32 1.0, %v417
        %v419 = vmul.f32 %v416, %v418
        %v420 = vadd.f32 %v416, %v419
        %vm421 = vweird.f32 %v409
        %vm422 = vweird.f32 %v416
        %vm423 = vmor %vm421, %vm422
        %v424 = vsel %vm423, %v416, %v420
        %v425 = vand.u32 2147483647, %v409
        %vm426 = vcmp.eq.f32.partialorder %v425, 8.507059e+37
        %v427 = vand.u32 %v409, 2147483648
        %v428 = vor.u32 1.1754944e-38, %v427
        %v429 = vsel %vm426, %v428, %v424
        %v430 = vmul.f32 %v401, %v429
        %v431 = vrcp.pop %v415
        %v432 = vmul.f32 %v415, %v431
        %v433 = vsub.f32 1.0, %v432
        %v434 = vmul.f32 %v431, %v433
        %v435 = vadd.f32 %v431, %v434
        %vm436 = vweird.f32 %v415
        %vm437 = vweird.f32 %v431
        %vm438 = vmor %vm436, %vm437
        %v439 = vsel %vm438, %v431, %v435
        %v440 = vand.u32 2147483647, %v415
        %vm441 = vcmp.eq.f32.partialorder %v440, 8.507059e+37
        %v442 = vand.u32 %v415, 2147483648
        %v443 = vor.u32 1.1754944e-38, %v442
        %v444 = vsel %vm441, %v443, %v439
        %v445 = vmul.f32 %v403, %v444
        %446 = vst [vmem:[%s242] sm:$0xff] %v430
        %447 = vst [vmem:[%s242 + $0x8] sm:$0xff] %v445
        %s448 = sand.u32 %s153, 1
        %s449 = scalar_lea.sflag [#allocation3], %s448
        %s450 = sand.u32 %s153, 1
        %s451 = smul.addr %s450, 16
        %s452 = scalar_lea.vmem [#allocation2], %s451
        // Predicated region
        $region41: #{tpu_custom_call.1} parent=39 // pred_check
          %p453 = pneg %p163
        $region42: #{tpu_custom_call.1} parent=39 // pred_check_branch
          %455 = sbr.rel (%p453) target = $region44
        $region43: #{tpu_custom_call.1} parent=39 // pred_region
          %s456 = smul.u32 2, %s24
          %458 = vsyncadd %s449, 0
          %s459 = smul.addr %s23, 2
          %s460 = sadd.s32 %s456, %s459
          %s461 = smul.addr %s460, 8
          %s462 = scalar_lea.hbm %s5, %s461
          %s464 = sshll.u32 %s452, 4
          %s465 = int_to_ptr.vmem [resolvable:$true] %s464
          %s466 = sshll.u32 %s462, 4
          %s467 = int_to_ptr.hbm [resolvable:$true] %s466
          %469 = dma.vmem_to_hbm [thread:$0]  %s465, 256, %s467, %s449
        $region44: #{tpu_custom_call.1} parent=39 // pred_fallthru
          _
      $region40: #{tpu_custom_call.1} parent=5 // pred_fallthru
        _
      %p470 = scmp.le.s32.totalorder 2, %s14
      // Predicated region
      $region45: #{tpu_custom_call.1} parent=5 // pred_check
        %p471 = pneg %p470
      $region46: #{tpu_custom_call.1} parent=5 // pred_check_branch
        %473 = sbr.rel (%p471) target = $region48
      $region47: #{tpu_custom_call.1} parent=5 // pred_region
        %s474 = ssub.s32 %s14, 2
        // Predicated region
        $region49: #{tpu_custom_call.1} parent=47 // pred_check
          %p475 = pneg %p169
        $region50: #{tpu_custom_call.1} parent=47 // pred_check_branch
          %477 = sbr.rel (%p475) target = $region52
        $region51: #{tpu_custom_call.1} parent=47 // pred_region
          %s478 = sand.u32 %s154, 1
          %s479 = scalar_lea.sflag [#allocation3], %s478
          %s480 = sand.u32 %s154, 1
          %s481 = smul.addr %s480, 16
          %s482 = scalar_lea.vmem [#allocation2], %s481
          %484 = dma.done %s479, 256
        $region52: #{tpu_custom_call.1} parent=47 // pred_fallthru
          _
      $region48: #{tpu_custom_call.1} parent=5 // pred_fallthru
        _
    $region6: #{tpu_custom_call.1} parent=1 // loop_footer
      %s18 = sadd.s32 1, %s14
    $region7: #{tpu_custom_call.1} parent=1 // loop_footer_branch
      %13 = sbr.rel target = $region3
    $region8: #{tpu_custom_call.1} parent=1 // loop_exit
      _
    %485 = vsyncpa [#allocation3], 1
    %s486 = scalar_lea.sflag [#allocation3], 1
    %487 = vsyncpa %s486, 1

</llo_original>
